<compile_context>
chip_gen: v7x
topology: tpu7x:2x2x1
jax: 0.10.0
libtpu: 0.0.40
codegen_flags: <defaults>
</compile_context>

<pallas_src>
import functools

import jax
import jax.numpy as jnp
from jax.experimental import pallas as pl
from jax.experimental.pallas import tpu as pltpu


def _round_up(x, m):
    return ((x + m - 1) // m) * m


def deepfm_kernel(x_ref, w1_ref, b1_ref, w2_ref, b2_ref, w3_ref, b3_ref,
                  w4fm_ref, w4dnn_ref, b4_ref, pred_ref, *,
                  num_fields, embedding_dim, d3_pad, d3_chunk):
    F, E = num_fields, embedding_dim

    x = x_ref[...]                                   # (TB, F*E) f32, pre-scaled

    # --- FM second-order term, f32 on the VPU --------------------------------
    # Only F static E-lane slice adds/squares remain (per-field scaling and the
    # lane-concat were moved to / removed by the wrapper).
    sum_emb = x[:, 0:E]
    sq_sum = x[:, 0:E] * x[:, 0:E]
    for f in range(1, F):
        xf = x[:, f * E:(f + 1) * E]
        sum_emb = sum_emb + xf
        sq_sum = sq_sum + xf * xf
    hidden_fm = 0.5 * (sum_emb * sum_emb - sq_sum)   # (TB, E) f32

    # --- DNN tower: bf16 on the MXU wire, f32 accumulation -------------------
    xw = x.astype(w1_ref.dtype)
    h = jnp.maximum(
        jnp.dot(xw, w1_ref[...], preferred_element_type=jnp.float32)
        + b1_ref[...], 0.0)
    h = jnp.maximum(
        jnp.dot(h.astype(w2_ref.dtype), w2_ref[...],
                preferred_element_type=jnp.float32) + b2_ref[...], 0.0)
    h = h.astype(w3_ref.dtype)                       # (TB, 32) bf16

    # --- fc3 + fc4(dnn part), chunked over 128-lane column tiles -------------
    # Peak live intermediate is (TB, 128) instead of (TB, 512); padded lanes
    # 400..511 of w3/b3/w4dnn are zero so they contribute nothing.
    dnn_term = None
    for j in range(0, d3_pad, d3_chunk):
        h3 = jnp.maximum(
            jnp.dot(h, w3_ref[:, j:j + d3_chunk],
                    preferred_element_type=jnp.float32)
            + b3_ref[:, j:j + d3_chunk], 0.0)
        part = jnp.sum(h3 * w4dnn_ref[:, j:j + d3_chunk],
                       axis=-1, keepdims=True)
        dnn_term = part if dnn_term is None else dnn_term + part

    # fc4: VPU multiply + lane reduction (no N=1 MXU pass).
    fm_term = jnp.sum(hidden_fm * w4fm_ref[...], axis=-1, keepdims=True)
    pred = dnn_term + fm_term + b4_ref[...]
    # TODO(synk): (TB, 1) output lowers to masked narrow-lane stores; accepted
    # (output bytes are tiny) and budgeted in vmem_limit_bytes instead of a
    # sublane->lane repack.
    pred_ref[...] = pred.astype(pred_ref.dtype)


def init_params(key, num_features, embedding_dim, num_fields,
                hidden_size=32, last_layer_dim=400):
    ks = jax.random.split(key, 5)
    in_dim = embedding_dim * num_fields

    def linear(k, fan_in, fan_out):
        kw, kb = jax.random.split(k)
        bound = 1.0 / jnp.sqrt(jnp.float32(fan_in))
        w = jax.random.uniform(kw, (fan_in, fan_out), jnp.float32, -bound, bound)
        b = jax.random.uniform(kb, (1, fan_out), jnp.float32, -bound, bound)
        return w, b

    emb = jax.random.normal(ks[0], (num_features, embedding_dim), jnp.float32) * 0.1
    w1, b1 = linear(ks[1], in_dim, hidden_size)
    w2, b2 = linear(ks[2], hidden_size, hidden_size)
    w3, b3 = linear(ks[3], hidden_size, last_layer_dim)
    w4, b4 = linear(ks[4], last_layer_dim + embedding_dim, 1)
    return dict(emb=emb, w1=w1, b1=b1, w2=w2, b2=b2, w3=w3, b3=b3, w4=w4, b4=b4)


def deepfm_forward(feature_ids, feature_vals, params, *, block_b=2048,
                   use_bf16=True):
    emb_table = params["emb"]
    B, F = feature_ids.shape
    E = emb_table.shape[1]
    FE = F * E
    cdtype = jnp.bfloat16 if use_bf16 else jnp.float32

    # --- JAX glue -------------------------------------------------------------
    # TODO(synk): the nn.Embedding gather is data-dependent indexing; kept in
    # XLA.  The per-field scaling is fused into its epilogue here (perf item 1)
    # and the slab stays f32 so the in-kernel FM cancellation is f32-accurate.
    x = (jnp.take(emb_table, feature_ids, axis=0)
         * feature_vals.astype(jnp.float32)[:, :, None]).reshape(B, FE)

    # Pad the 400-wide last DNN layer to a lane-dense 512.
    D3 = params["w3"].shape[1]
    D3p = _round_up(D3, 128)
    w1 = params["w1"].astype(cdtype)
    b1 = params["b1"]
    w2 = params["w2"].astype(cdtype)
    b2 = params["b2"]
    w3 = jnp.pad(params["w3"], ((0, 0), (0, D3p - D3))).astype(cdtype)
    b3 = jnp.pad(params["b3"], ((0, 0), (0, D3p - D3)))
    # fc4 weight split as row vectors: torch concat order = [hidden_fm (E), hidden_dnn (400)].
    w4fm = params["w4"][:E, 0][None, :]                            # (1, E)   f32
    w4dnn = jnp.pad(params["w4"][E:, 0], (0, D3p - D3))[None, :]   # (1, D3p) f32
    b4 = params["b4"]                                              # (1, 1)

    # --- batch tiling (near-even tiles; grid >= 2 when B > block_b so the
    # batch axis shards across megacore TensorCores) ---------------------------
    ntiles = max(1, -(-B // block_b))
    TB = _round_up(-(-B // ntiles), 8)
    Bp = TB * ntiles
    if Bp != B:
        x = jnp.pad(x, ((0, Bp - B), (0, 0)))
    grid = (ntiles,)

    # VMEM budget per row: in/out pipeline buffers lane-pad to 128 lanes
    # (2 * 512 B each, double-buffered) plus ~3.5 KiB of f32 intermediates;
    # round to 8 KiB/row headroom, plus ~2 MiB for the resident weights.
    vmem_limit = int(min(48 << 20, max(8 << 20, 8192 * TB + (2 << 20))))

    def _const_spec(arr):
        return pl.BlockSpec(arr.shape, lambda i: (0, 0))

    kernel = functools.partial(deepfm_kernel, num_fields=F, embedding_dim=E,
                               d3_pad=D3p, d3_chunk=128)

    pred = pl.pallas_call(
        kernel,
        out_shape=jax.ShapeDtypeStruct((Bp, 1), jnp.float32),
        grid=grid,
        in_specs=[
            pl.BlockSpec((TB, FE), lambda i: (i, 0)),   # pre-scaled embeddings
            _const_spec(w1), _const_spec(b1),
            _const_spec(w2), _const_spec(b2),
            _const_spec(w3), _const_spec(b3),
            _const_spec(w4fm), _const_spec(w4dnn), _const_spec(b4),
        ],
        out_specs=pl.BlockSpec((TB, 1), lambda i: (i, 0)),
        compiler_params=pltpu.CompilerParams(
            dimension_semantics=("parallel",),
            vmem_limit_bytes=vmem_limit),
    )(x, w1, b1, w2, b2, w3, b3, w4fm, w4dnn, b4)
    return pred[:B, 0]                                             # (B,)


def deepfm_reference(feature_ids, feature_vals, params):
    """Pure-JAX f32 reference matching the PyTorch forward exactly."""
    emb = jnp.take(params["emb"], feature_ids, axis=0)
    emb = emb * feature_vals[:, :, None]
    square_sum = jnp.sum(emb ** 2, axis=1)
    sum_square = jnp.sum(emb, axis=1) ** 2
    hidden_fm = (sum_square - square_sum) / 2
    flat = emb.reshape(emb.shape[0], -1)
    h = jax.nn.relu(flat @ params["w1"] + params["b1"])
    h = jax.nn.relu(h @ params["w2"] + params["b2"])
    hidden_dnn = jax.nn.relu(h @ params["w3"] + params["b3"])
    enc = jnp.concatenate([hidden_fm, hidden_dnn], axis=1)
    return (enc @ params["w4"] + params["b4"])[:, 0]


if __name__ == "__main__":
    # small shapes consistent with the module
    num_features = 32
    embedding_dim = 8
    num_fields = 4
    hidden_size = 32
    batch = 8

    key = jax.random.PRNGKey(0)
    k_params, k_ids, k_vals = jax.random.split(key, 3)

    params = init_params(k_params, num_features, embedding_dim, num_fields,
                         hidden_size=hidden_size, last_layer_dim=400)
    feature_ids = jax.random.randint(k_ids, (batch, num_fields), 0, num_features,
                                     dtype=jnp.int32)
    feature_vals = jax.random.uniform(k_vals, (batch, num_fields), jnp.float32)

    pred = deepfm_forward(feature_ids, feature_vals, params)
    pred = jax.block_until_ready(pred)

    ref = jax.block_until_ready(deepfm_reference(feature_ids, feature_vals, params))
    assert pred.shape == (batch,)
    # FM path is now f32 end-to-end; only the bf16 MXU tower contributes error.
    assert jnp.allclose(pred, ref, rtol=2e-2, atol=2e-2), (pred, ref)

    print("KERNEL_OK")
</pallas_src>

<mosaic_0001>
module attributes {stable_mosaic.version = 11 : i64} {
  func.func @deepfm_kernel(%arg0: i32, %arg1: memref<8x32xf32, #tpu.memory_space<vmem>>, %arg2: memref<32x32xbf16, #tpu.memory_space<vmem>>, %arg3: memref<1x32xf32, #tpu.memory_space<vmem>>, %arg4: memref<32x32xbf16, #tpu.memory_space<vmem>>, %arg5: memref<1x32xf32, #tpu.memory_space<vmem>>, %arg6: memref<32x512xbf16, #tpu.memory_space<vmem>>, %arg7: memref<1x512xf32, #tpu.memory_space<vmem>>, %arg8: memref<1x8xf32, #tpu.memory_space<vmem>>, %arg9: memref<1x512xf32, #tpu.memory_space<vmem>>, %arg10: memref<1x1xf32, #tpu.memory_space<vmem>>, %arg11: memref<8x1xf32, #tpu.memory_space<vmem>>) attributes {dimension_semantics = [#tpu.dimension_semantics<parallel>], iteration_bounds = array<i64: 1>, scalar_prefetch = 0 : i64, scratch_operands = 0 : i64, tpu.core_type = #tpu.core_type<tc>, window_params = [{transform_indices = @transform_0, window_bounds = array<i64: 8, 32>}, {pipeline_mode = #tpu.pipeline_mode<synchronous>, transform_indices = @transform_1, window_bounds = array<i64: 32, 32>}, {pipeline_mode = #tpu.pipeline_mode<synchronous>, transform_indices = @transform_2, window_bounds = array<i64: 1, 32>}, {pipeline_mode = #tpu.pipeline_mode<synchronous>, transform_indices = @transform_3, window_bounds = array<i64: 32, 32>}, {pipeline_mode = #tpu.pipeline_mode<synchronous>, transform_indices = @transform_4, window_bounds = array<i64: 1, 32>}, {pipeline_mode = #tpu.pipeline_mode<synchronous>, transform_indices = @transform_5, window_bounds = array<i64: 32, 512>}, {pipeline_mode = #tpu.pipeline_mode<synchronous>, transform_indices = @transform_6, window_bounds = array<i64: 1, 512>}, {pipeline_mode = #tpu.pipeline_mode<synchronous>, transform_indices = @transform_7, window_bounds = array<i64: 1, 8>}, {pipeline_mode = #tpu.pipeline_mode<synchronous>, transform_indices = @transform_8, window_bounds = array<i64: 1, 512>}, {pipeline_mode = #tpu.pipeline_mode<synchronous>, transform_indices = @transform_9, window_bounds = array<i64: 1, 1>}, {transform_indices = @transform_10, window_bounds = array<i64: 8, 1>}]} {
    %c0 = arith.constant 0 : index
    %c0_0 = arith.constant 0 : index
    %0 = vector.load %arg1[%c0, %c0_0] : memref<8x32xf32, #tpu.memory_space<vmem>>, vector<8x32xf32>
    %1 = vector.extract_strided_slice %0 {offsets = [0, 0], sizes = [8, 8], strides = [1, 1]} : vector<8x32xf32> to vector<8x8xf32>
    %2 = vector.extract_strided_slice %0 {offsets = [0, 0], sizes = [8, 8], strides = [1, 1]} : vector<8x32xf32> to vector<8x8xf32>
    %3 = vector.extract_strided_slice %0 {offsets = [0, 0], sizes = [8, 8], strides = [1, 1]} : vector<8x32xf32> to vector<8x8xf32>
    %4 = arith.mulf %2, %3 : vector<8x8xf32>
    %5 = vector.extract_strided_slice %0 {offsets = [0, 8], sizes = [8, 8], strides = [1, 1]} : vector<8x32xf32> to vector<8x8xf32>
    %6 = arith.addf %1, %5 : vector<8x8xf32>
    %7 = arith.mulf %5, %5 : vector<8x8xf32>
    %8 = arith.addf %4, %7 : vector<8x8xf32>
    %9 = vector.extract_strided_slice %0 {offsets = [0, 16], sizes = [8, 8], strides = [1, 1]} : vector<8x32xf32> to vector<8x8xf32>
    %10 = arith.addf %6, %9 : vector<8x8xf32>
    %11 = arith.mulf %9, %9 : vector<8x8xf32>
    %12 = arith.addf %8, %11 : vector<8x8xf32>
    %13 = vector.extract_strided_slice %0 {offsets = [0, 24], sizes = [8, 8], strides = [1, 1]} : vector<8x32xf32> to vector<8x8xf32>
    %14 = arith.addf %10, %13 : vector<8x8xf32>
    %15 = arith.mulf %13, %13 : vector<8x8xf32>
    %16 = arith.addf %12, %15 : vector<8x8xf32>
    %17 = arith.mulf %14, %14 : vector<8x8xf32>
    %18 = arith.subf %17, %16 : vector<8x8xf32>
    %cst = arith.constant 5.000000e-01 : f32
    %19 = vector.broadcast %cst : f32 to vector<8x8xf32>
    %20 = arith.mulf %19, %18 : vector<8x8xf32>
    %21 = arith.truncf %0 : vector<8x32xf32> to vector<8x32xbf16>
    %c0_1 = arith.constant 0 : index
    %c0_2 = arith.constant 0 : index
    %22 = vector.load %arg2[%c0_1, %c0_2] : memref<32x32xbf16, #tpu.memory_space<vmem>>, vector<32x32xbf16>
    %cst_3 = arith.constant dense<0.000000e+00> : vector<8x32xf32>
    %23 = tpu.matmul %21, %22, %cst_3 {dimension_numbers = #tpu.dot_dimension_numbers<[1], [0], [0], [1], [0, 0, 1, 1], [], []>} : vector<8x32xbf16>, vector<32x32xbf16>, vector<8x32xf32> -> vector<8x32xf32>
    %c0_4 = arith.constant 0 : index
    %c0_5 = arith.constant 0 : index
    %24 = vector.load %arg3[%c0_4, %c0_5] : memref<1x32xf32, #tpu.memory_space<vmem>>, vector<1x32xf32>
    %25 = vector.broadcast %24 : vector<1x32xf32> to vector<8x32xf32>
    %26 = arith.addf %23, %25 : vector<8x32xf32>
    %cst_6 = arith.constant 0.000000e+00 : f32
    %27 = vector.broadcast %cst_6 : f32 to vector<8x32xf32>
    %28 = arith.maximumf %26, %27 : vector<8x32xf32>
    %29 = arith.truncf %28 : vector<8x32xf32> to vector<8x32xbf16>
    %c0_7 = arith.constant 0 : index
    %c0_8 = arith.constant 0 : index
    %30 = vector.load %arg4[%c0_7, %c0_8] : memref<32x32xbf16, #tpu.memory_space<vmem>>, vector<32x32xbf16>
    %cst_9 = arith.constant dense<0.000000e+00> : vector<8x32xf32>
    %31 = tpu.matmul %29, %30, %cst_9 {dimension_numbers = #tpu.dot_dimension_numbers<[1], [0], [0], [1], [0, 0, 1, 1], [], []>} : vector<8x32xbf16>, vector<32x32xbf16>, vector<8x32xf32> -> vector<8x32xf32>
    %c0_10 = arith.constant 0 : index
    %c0_11 = arith.constant 0 : index
    %32 = vector.load %arg5[%c0_10, %c0_11] : memref<1x32xf32, #tpu.memory_space<vmem>>, vector<1x32xf32>
    %33 = vector.broadcast %32 : vector<1x32xf32> to vector<8x32xf32>
    %34 = arith.addf %31, %33 : vector<8x32xf32>
    %cst_12 = arith.constant 0.000000e+00 : f32
    %35 = vector.broadcast %cst_12 : f32 to vector<8x32xf32>
    %36 = arith.maximumf %34, %35 : vector<8x32xf32>
    %37 = arith.truncf %36 : vector<8x32xf32> to vector<8x32xbf16>
    %c0_13 = arith.constant 0 : index
    %c0_14 = arith.constant 0 : index
    %38 = vector.load %arg6[%c0_13, %c0_14] : memref<32x512xbf16, #tpu.memory_space<vmem>>, vector<32x128xbf16>
    %cst_15 = arith.constant dense<0.000000e+00> : vector<8x128xf32>
    %39 = tpu.matmul %37, %38, %cst_15 {dimension_numbers = #tpu.dot_dimension_numbers<[1], [0], [0], [1], [0, 0, 1, 1], [], []>} : vector<8x32xbf16>, vector<32x128xbf16>, vector<8x128xf32> -> vector<8x128xf32>
    %c0_16 = arith.constant 0 : index
    %c0_17 = arith.constant 0 : index
    %40 = vector.load %arg7[%c0_16, %c0_17] : memref<1x512xf32, #tpu.memory_space<vmem>>, vector<1x128xf32>
    %41 = vector.broadcast %40 : vector<1x128xf32> to vector<8x128xf32>
    %42 = arith.addf %39, %41 : vector<8x128xf32>
    %cst_18 = arith.constant 0.000000e+00 : f32
    %43 = vector.broadcast %cst_18 : f32 to vector<8x128xf32>
    %44 = arith.maximumf %42, %43 : vector<8x128xf32>
    %c0_19 = arith.constant 0 : index
    %c0_20 = arith.constant 0 : index
    %45 = vector.load %arg9[%c0_19, %c0_20] : memref<1x512xf32, #tpu.memory_space<vmem>>, vector<1x128xf32>
    %46 = vector.broadcast %45 : vector<1x128xf32> to vector<8x128xf32>
    %47 = arith.mulf %44, %46 : vector<8x128xf32>
    %cst_21 = arith.constant dense<0.000000e+00> : vector<8xf32>
    %48 = vector.multi_reduction <add>, %47, %cst_21 [1] : vector<8x128xf32> to vector<8xf32>
    %49 = vector.shape_cast %48 : vector<8xf32> to vector<8x1xf32>
    %c0_22 = arith.constant 0 : index
    %c128 = arith.constant 128 : index
    %50 = vector.load %arg6[%c0_22, %c128] : memref<32x512xbf16, #tpu.memory_space<vmem>>, vector<32x128xbf16>
    %cst_23 = arith.constant dense<0.000000e+00> : vector<8x128xf32>
    %51 = tpu.matmul %37, %50, %cst_23 {dimension_numbers = #tpu.dot_dimension_numbers<[1], [0], [0], [1], [0, 0, 1, 1], [], []>} : vector<8x32xbf16>, vector<32x128xbf16>, vector<8x128xf32> -> vector<8x128xf32>
    %c0_24 = arith.constant 0 : index
    %c128_25 = arith.constant 128 : index
    %52 = vector.load %arg7[%c0_24, %c128_25] : memref<1x512xf32, #tpu.memory_space<vmem>>, vector<1x128xf32>
    %53 = vector.broadcast %52 : vector<1x128xf32> to vector<8x128xf32>
    %54 = arith.addf %51, %53 : vector<8x128xf32>
    %cst_26 = arith.constant 0.000000e+00 : f32
    %55 = vector.broadcast %cst_26 : f32 to vector<8x128xf32>
    %56 = arith.maximumf %54, %55 : vector<8x128xf32>
    %c0_27 = arith.constant 0 : index
    %c128_28 = arith.constant 128 : index
    %57 = vector.load %arg9[%c0_27, %c128_28] : memref<1x512xf32, #tpu.memory_space<vmem>>, vector<1x128xf32>
    %58 = vector.broadcast %57 : vector<1x128xf32> to vector<8x128xf32>
    %59 = arith.mulf %56, %58 : vector<8x128xf32>
    %cst_29 = arith.constant dense<0.000000e+00> : vector<8xf32>
    %60 = vector.multi_reduction <add>, %59, %cst_29 [1] : vector<8x128xf32> to vector<8xf32>
    %61 = vector.shape_cast %60 : vector<8xf32> to vector<8x1xf32>
    %62 = arith.addf %49, %61 : vector<8x1xf32>
    %c0_30 = arith.constant 0 : index
    %c256 = arith.constant 256 : index
    %63 = vector.load %arg6[%c0_30, %c256] : memref<32x512xbf16, #tpu.memory_space<vmem>>, vector<32x128xbf16>
    %cst_31 = arith.constant dense<0.000000e+00> : vector<8x128xf32>
    %64 = tpu.matmul %37, %63, %cst_31 {dimension_numbers = #tpu.dot_dimension_numbers<[1], [0], [0], [1], [0, 0, 1, 1], [], []>} : vector<8x32xbf16>, vector<32x128xbf16>, vector<8x128xf32> -> vector<8x128xf32>
    %c0_32 = arith.constant 0 : index
    %c256_33 = arith.constant 256 : index
    %65 = vector.load %arg7[%c0_32, %c256_33] : memref<1x512xf32, #tpu.memory_space<vmem>>, vector<1x128xf32>
    %66 = vector.broadcast %65 : vector<1x128xf32> to vector<8x128xf32>
    %67 = arith.addf %64, %66 : vector<8x128xf32>
    %cst_34 = arith.constant 0.000000e+00 : f32
    %68 = vector.broadcast %cst_34 : f32 to vector<8x128xf32>
    %69 = arith.maximumf %67, %68 : vector<8x128xf32>
    %c0_35 = arith.constant 0 : index
    %c256_36 = arith.constant 256 : index
    %70 = vector.load %arg9[%c0_35, %c256_36] : memref<1x512xf32, #tpu.memory_space<vmem>>, vector<1x128xf32>
    %71 = vector.broadcast %70 : vector<1x128xf32> to vector<8x128xf32>
    %72 = arith.mulf %69, %71 : vector<8x128xf32>
    %cst_37 = arith.constant dense<0.000000e+00> : vector<8xf32>
    %73 = vector.multi_reduction <add>, %72, %cst_37 [1] : vector<8x128xf32> to vector<8xf32>
    %74 = vector.shape_cast %73 : vector<8xf32> to vector<8x1xf32>
    %75 = arith.addf %62, %74 : vector<8x1xf32>
    %c0_38 = arith.constant 0 : index
    %c384 = arith.constant 384 : index
    %76 = vector.load %arg6[%c0_38, %c384] : memref<32x512xbf16, #tpu.memory_space<vmem>>, vector<32x128xbf16>
    %cst_39 = arith.constant dense<0.000000e+00> : vector<8x128xf32>
    %77 = tpu.matmul %37, %76, %cst_39 {dimension_numbers = #tpu.dot_dimension_numbers<[1], [0], [0], [1], [0, 0, 1, 1], [], []>} : vector<8x32xbf16>, vector<32x128xbf16>, vector<8x128xf32> -> vector<8x128xf32>
    %c0_40 = arith.constant 0 : index
    %c384_41 = arith.constant 384 : index
    %78 = vector.load %arg7[%c0_40, %c384_41] : memref<1x512xf32, #tpu.memory_space<vmem>>, vector<1x128xf32>
    %79 = vector.broadcast %78 : vector<1x128xf32> to vector<8x128xf32>
    %80 = arith.addf %77, %79 : vector<8x128xf32>
    %cst_42 = arith.constant 0.000000e+00 : f32
    %81 = vector.broadcast %cst_42 : f32 to vector<8x128xf32>
    %82 = arith.maximumf %80, %81 : vector<8x128xf32>
    %c0_43 = arith.constant 0 : index
    %c384_44 = arith.constant 384 : index
    %83 = vector.load %arg9[%c0_43, %c384_44] : memref<1x512xf32, #tpu.memory_space<vmem>>, vector<1x128xf32>
    %84 = vector.broadcast %83 : vector<1x128xf32> to vector<8x128xf32>
    %85 = arith.mulf %82, %84 : vector<8x128xf32>
    %cst_45 = arith.constant dense<0.000000e+00> : vector<8xf32>
    %86 = vector.multi_reduction <add>, %85, %cst_45 [1] : vector<8x128xf32> to vector<8xf32>
    %87 = vector.shape_cast %86 : vector<8xf32> to vector<8x1xf32>
    %88 = arith.addf %75, %87 : vector<8x1xf32>
    %c0_46 = arith.constant 0 : index
    %c0_47 = arith.constant 0 : index
    %89 = vector.load %arg8[%c0_46, %c0_47] : memref<1x8xf32, #tpu.memory_space<vmem>>, vector<1x8xf32>
    %90 = vector.broadcast %89 : vector<1x8xf32> to vector<8x8xf32>
    %91 = arith.mulf %20, %90 : vector<8x8xf32>
    %cst_48 = arith.constant dense<0.000000e+00> : vector<8xf32>
    %92 = vector.multi_reduction <add>, %91, %cst_48 [1] : vector<8x8xf32> to vector<8xf32>
    %93 = vector.shape_cast %92 : vector<8xf32> to vector<8x1xf32>
    %94 = arith.addf %88, %93 : vector<8x1xf32>
    %c0_49 = arith.constant 0 : index
    %c0_50 = arith.constant 0 : index
    %95 = vector.load %arg10[%c0_49, %c0_50] : memref<1x1xf32, #tpu.memory_space<vmem>>, vector<1x1xf32>
    %96 = vector.broadcast %95 : vector<1x1xf32> to vector<8x1xf32>
    %97 = arith.addf %94, %96 : vector<8x1xf32>
    %c0_51 = arith.constant 0 : index
    %c0_52 = arith.constant 0 : index
    %98 = vector.load %arg11[%c0_51, %c0_52] : memref<8x1xf32, #tpu.memory_space<vmem>>, vector<8x1xf32>
    tpu.vector_store %arg11[%c0_51, %c0_52], %97 {strides = array<i32>} : memref<8x1xf32, #tpu.memory_space<vmem>>, vector<8x1xf32>,
    return
  }
  func.func @transform_0(%arg0: i32) -> (i32, i32) {
    %c0_i32 = arith.constant 0 : i32
    %c0_i32_0 = arith.constant 0 : i32
    return %arg0, %c0_i32 : i32, i32
  }
  func.func @transform_1(%arg0: i32) -> (i32, i32) {
    %c0_i32 = arith.constant 0 : i32
    %c0_i32_0 = arith.constant 0 : i32
    %c0_i32_1 = arith.constant 0 : i32
    return %c0_i32, %c0_i32_0 : i32, i32
  }
  func.func @transform_2(%arg0: i32) -> (i32, i32) {
    %c0_i32 = arith.constant 0 : i32
    %c0_i32_0 = arith.constant 0 : i32
    %c0_i32_1 = arith.constant 0 : i32
    return %c0_i32, %c0_i32_0 : i32, i32
  }
  func.func @transform_3(%arg0: i32) -> (i32, i32) {
    %c0_i32 = arith.constant 0 : i32
    %c0_i32_0 = arith.constant 0 : i32
    %c0_i32_1 = arith.constant 0 : i32
    return %c0_i32, %c0_i32_0 : i32, i32
  }
  func.func @transform_4(%arg0: i32) -> (i32, i32) {
    %c0_i32 = arith.constant 0 : i32
    %c0_i32_0 = arith.constant 0 : i32
    %c0_i32_1 = arith.constant 0 : i32
    return %c0_i32, %c0_i32_0 : i32, i32
  }
  func.func @transform_5(%arg0: i32) -> (i32, i32) {
    %c0_i32 = arith.constant 0 : i32
    %c0_i32_0 = arith.constant 0 : i32
    %c0_i32_1 = arith.constant 0 : i32
    return %c0_i32, %c0_i32_0 : i32, i32
  }
  func.func @transform_6(%arg0: i32) -> (i32, i32) {
    %c0_i32 = arith.constant 0 : i32
    %c0_i32_0 = arith.constant 0 : i32
    %c0_i32_1 = arith.constant 0 : i32
    return %c0_i32, %c0_i32_0 : i32, i32
  }
  func.func @transform_7(%arg0: i32) -> (i32, i32) {
    %c0_i32 = arith.constant 0 : i32
    %c0_i32_0 = arith.constant 0 : i32
    %c0_i32_1 = arith.constant 0 : i32
    return %c0_i32, %c0_i32_0 : i32, i32
  }
  func.func @transform_8(%arg0: i32) -> (i32, i32) {
    %c0_i32 = arith.constant 0 : i32
    %c0_i32_0 = arith.constant 0 : i32
    %c0_i32_1 = arith.constant 0 : i32
    return %c0_i32, %c0_i32_0 : i32, i32
  }
  func.func @transform_9(%arg0: i32) -> (i32, i32) {
    %c0_i32 = arith.constant 0 : i32
    %c0_i32_0 = arith.constant 0 : i32
    %c0_i32_1 = arith.constant 0 : i32
    return %c0_i32, %c0_i32_0 : i32, i32
  }
  func.func @transform_10(%arg0: i32) -> (i32, i32) {
    %c0_i32 = arith.constant 0 : i32
    %c0_i32_0 = arith.constant 0 : i32
    return %arg0, %c0_i32 : i32, i32
  }
}

</mosaic_0001>

<llo_original>
// kernel: tpu_custom_call.1
$region0: #{tpu_custom_call.1}
  #allocation0 [shape = 'u32[]', space=smem, size = 0x4, offset = 0x4, fixed_abs, tag = 'smem constant byte address 0x4 - core index']
  #allocation1 [shape = 'u32[144,128]{1,0:T(1,128)}', space=vmem, size = 0x12000, scoped, tag = 'internal scratch']
  #allocation2 [shape = 'f32[1,1]{1,0:T(1,128)S(1)}', space=vmem, size = 0x200, scoped, tag = 'scoped memory for tpu_custom_call.1']
  %s0 = inlined_call_operand.hbm [shape: f32[8,32], index: 0, kind: input, shape index: {}]
  %s1 = inlined_call_operand.hbm [shape: bf16[32,32], index: 1, kind: input, shape index: {}]
  %s2 = inlined_call_operand.vmem [shape: f32[1,32], index: 2, kind: input, shape index: {}]
  %s3 = inlined_call_operand.hbm [shape: bf16[32,32], index: 3, kind: input, shape index: {}]
  %s4 = inlined_call_operand.vmem [shape: f32[1,32], index: 4, kind: input, shape index: {}]
  %s5 = inlined_call_operand.hbm [shape: bf16[32,512], index: 5, kind: input, shape index: {}]
  %s6 = inlined_call_operand.vmem [shape: f32[1,512], index: 6, kind: input, shape index: {}]
  %s7 = inlined_call_operand.vmem [shape: f32[1,8], index: 7, kind: input, shape index: {}]
  %s8 = inlined_call_operand.vmem [shape: f32[1,512], index: 8, kind: input, shape index: {}]
  %s9 = inlined_call_operand.<no memory space> [shape: f32[1,1], index: 9, kind: input, shape index: {}]
  %s10 = inlined_call_operand.vmem [shape: f32[8,1], index: 10, kind: output, shape index: {}]
  %s11 = sld [smem:[#allocation0]]
  $region66: #{tpu_custom_call.1} parent=0
    _
  %s13 = ssub.s32 1, %s11
  %s14 = scalar_select 0, %s13, %s11
  %v15 = vstv %s9
  %16 = vst [vmem:[#allocation2] sm:$0x1] %v15
  $region1: #{tpu_custom_call.1} parent=0
    #allocation3 [shape = 'u8[4096]{0}', space=vmem, size = 0x1000, scoped, tag = 'input window, operand 0, single buffered']
    #allocation4 [shape = 's32[1]{0}', space=sflag, size = 0x4, scoped, tag = 'scoped memory for tpu_custom_call.1']
    #allocation5 [shape = 'u8[8192]{0}', space=vmem, size = 0x2000, scoped, tag = 'input window, operand 1, single buffered']
    #allocation6 [shape = 's32[1]{0}', space=sflag, size = 0x4, scoped, tag = 'scoped memory for tpu_custom_call.1']
    #allocation7 [shape = 'u8[8192]{0}', space=vmem, size = 0x2000, scoped, tag = 'input window, operand 3, single buffered']
    #allocation8 [shape = 'u8[32768]{0}', space=vmem, size = 0x8000, scoped, tag = 'input window, operand 5, single buffered']
    #allocation9 [shape = 's32[1]{0}', space=sflag, size = 0x4, scoped, tag = 'scoped memory for tpu_custom_call.1']
    %17 = vsyncpa [#allocation4], 0
    %18 = vsyncpa [#allocation6], 0
    %19 = vsyncpa [#allocation9], 0
    // Predicated region
    $region2: #{tpu_custom_call.1} parent=1 // pred_check
      _
    $region3: #{tpu_custom_call.1} parent=1 // pred_check_branch
      %21 = sbr.rel (0) target = $region5
    $region4: #{tpu_custom_call.1} parent=1 // pred_region
      %s23 = ssub.s32 128, 128
      %24 = vsyncadd [#allocation4], %s23
      %s26 = sshll.u32 [#allocation3], 4
      %s27 = int_to_ptr.vmem [resolvable:$true] %s26
      %29 = dma.hbm_to_vmem [thread:$0]  %s0, 128, %s27, [#allocation4]
    $region5: #{tpu_custom_call.1} parent=1 // pred_fallthru
      _
    // Predicated region
    $region6: #{tpu_custom_call.1} parent=1 // pred_check
      _
    $region7: #{tpu_custom_call.1} parent=1 // pred_check_branch
      %31 = sbr.rel (0) target = $region9
    $region8: #{tpu_custom_call.1} parent=1 // pred_region
      %s33 = ssub.s32 256, 256
      %34 = vsyncadd [#allocation6], %s33
      %s35 = sshll.u32 [#allocation5], 4
      %s36 = int_to_ptr.vmem [resolvable:$true] %s35
      %41 = dma.hbm_to_vmem [thread:$0]  %s1, 256, %s36, [#allocation6], 64, 64, 4
    $region9: #{tpu_custom_call.1} parent=1 // pred_fallthru
      _
    // Predicated region
    $region10: #{tpu_custom_call.1} parent=1 // pred_check
      _
    $region11: #{tpu_custom_call.1} parent=1 // pred_check_branch
      %43 = sbr.rel (0) target = $region13
    $region12: #{tpu_custom_call.1} parent=1 // pred_region
      _
    $region13: #{tpu_custom_call.1} parent=1 // pred_fallthru
      _
    // Predicated region
    $region14: #{tpu_custom_call.1} parent=1 // pred_check
      _
    $region15: #{tpu_custom_call.1} parent=1 // pred_check_branch
      %45 = sbr.rel (0) target = $region17
    $region16: #{tpu_custom_call.1} parent=1 // pred_region
      %s47 = ssub.s32 256, 256
      %48 = vsyncadd [#allocation6], %s47
      %s49 = sshll.u32 [#allocation7], 4
      %s50 = int_to_ptr.vmem [resolvable:$true] %s49
      %55 = dma.hbm_to_vmem [thread:$0]  %s3, 256, %s50, [#allocation6], 64, 64, 4
    $region17: #{tpu_custom_call.1} parent=1 // pred_fallthru
      _
    // Predicated region
    $region18: #{tpu_custom_call.1} parent=1 // pred_check
      _
    $region19: #{tpu_custom_call.1} parent=1 // pred_check_branch
      %57 = sbr.rel (0) target = $region21
    $region20: #{tpu_custom_call.1} parent=1 // pred_region
      _
    $region21: #{tpu_custom_call.1} parent=1 // pred_fallthru
      _
    // Predicated region
    $region22: #{tpu_custom_call.1} parent=1 // pred_check
      _
    $region23: #{tpu_custom_call.1} parent=1 // pred_check_branch
      %59 = sbr.rel (0) target = $region25
    $region24: #{tpu_custom_call.1} parent=1 // pred_region
      %s61 = ssub.s32 1024, 1024
      %62 = vsyncadd [#allocation9], %s61
      %s63 = sshll.u32 [#allocation8], 4
      %s64 = int_to_ptr.vmem [resolvable:$true] %s63
      %69 = dma.hbm_to_vmem [thread:$0]  %s5, 1024, %s64, [#allocation9], 256, 256, 16
    $region25: #{tpu_custom_call.1} parent=1 // pred_fallthru
      _
    // Predicated region
    $region26: #{tpu_custom_call.1} parent=1 // pred_check
      _
    $region27: #{tpu_custom_call.1} parent=1 // pred_check_branch
      %71 = sbr.rel (0) target = $region29
    $region28: #{tpu_custom_call.1} parent=1 // pred_region
      _
    $region29: #{tpu_custom_call.1} parent=1 // pred_fallthru
      _
    // Predicated region
    $region30: #{tpu_custom_call.1} parent=1 // pred_check
      _
    $region31: #{tpu_custom_call.1} parent=1 // pred_check_branch
      %73 = sbr.rel (0) target = $region33
    $region32: #{tpu_custom_call.1} parent=1 // pred_region
      _
    $region33: #{tpu_custom_call.1} parent=1 // pred_fallthru
      _
    // Predicated region
    $region34: #{tpu_custom_call.1} parent=1 // pred_check
      _
    $region35: #{tpu_custom_call.1} parent=1 // pred_check_branch
      %75 = sbr.rel (0) target = $region37
    $region36: #{tpu_custom_call.1} parent=1 // pred_region
      _
    $region37: #{tpu_custom_call.1} parent=1 // pred_fallthru
      _
    // Predicated region
    $region38: #{tpu_custom_call.1} parent=1 // pred_check
      _
    $region39: #{tpu_custom_call.1} parent=1 // pred_check_branch
      %77 = sbr.rel (0) target = $region41
    $region40: #{tpu_custom_call.1} parent=1 // pred_region
      _
    $region41: #{tpu_custom_call.1} parent=1 // pred_fallthru
      _
    // Predicated region
    $region42: #{tpu_custom_call.1} parent=1 // pred_check
      _
    $region43: #{tpu_custom_call.1} parent=1 // pred_check_branch
      %79 = sbr.rel (0) target = $region45
    $region44: #{tpu_custom_call.1} parent=1 // pred_region
      %80 = dma.done [#allocation4], 128
    $region45: #{tpu_custom_call.1} parent=1 // pred_fallthru
      _
    // Predicated region
    $region46: #{tpu_custom_call.1} parent=1 // pred_check
      _
    $region47: #{tpu_custom_call.1} parent=1 // pred_check_branch
      %82 = sbr.rel (0) target = $region49
    $region48: #{tpu_custom_call.1} parent=1 // pred_region
      %83 = dma.done [#allocation6], 256
    $region49: #{tpu_custom_call.1} parent=1 // pred_fallthru
      _
    // Predicated region
    $region50: #{tpu_custom_call.1} parent=1 // pred_check
      _
    $region51: #{tpu_custom_call.1} parent=1 // pred_check_branch
      %85 = sbr.rel (0) target = $region53
    $region52: #{tpu_custom_call.1} parent=1 // pred_region
      %86 = dma.done [#allocation6], 256
    $region53: #{tpu_custom_call.1} parent=1 // pred_fallthru
      _
    // Predicated region
    $region54: #{tpu_custom_call.1} parent=1 // pred_check
      _
    $region55: #{tpu_custom_call.1} parent=1 // pred_check_branch
      %88 = sbr.rel (0) target = $region57
    $region56: #{tpu_custom_call.1} parent=1 // pred_region
      %89 = dma.done [#allocation9], 1024
    $region57: #{tpu_custom_call.1} parent=1 // pred_fallthru
      _
    %v91 = vld [vmem:[#allocation3] sm:$0xff]
    %v92 = vmul.f32 %v91, %v91
    %94 = vrot.lane.b32.xlu0 %v91, 120
    %v95 = vpop.permute.xlu0 %94
    %v97 = vadd.f32 %v91, %v95
    %99 = vrot.lane.b32.xlu0 %v92, 120
    %v100 = vpop.permute.xlu0 %99
    %v102 = vadd.f32 %v92, %v100
    %103 = vrot.lane.b32.xlu0 %v91, 112
    %v104 = vpop.permute.xlu0 %103
    %v106 = vadd.f32 %v97, %v104
    %107 = vrot.lane.b32.xlu0 %v92, 112
    %v108 = vpop.permute.xlu0 %107
    %v110 = vadd.f32 %v102, %v108
    %111 = vrot.lane.b32.xlu0 %v91, 104
    %v112 = vpop.permute.xlu0 %111
    %v114 = vadd.f32 %v106, %v112
    %115 = vrot.lane.b32.xlu0 %v92, 104
    %v116 = vpop.permute.xlu0 %115
    %v118 = vadd.f32 %v110, %v116
    %v119 = vmul.f32 %v114, %v114
    %v120 = vsub.f32 %v119, %v118
    %v121 = vmul.f32 %v120, 0.5
    %v122 = vpack.c.bf16 %v91, %v91
    %v123 = vld [vmem:[#allocation5] sm:$0xf]
    %v124 = vld [vmem:[#allocation5 + $0x4] sm:$0xf]
    %v125 = vld [vmem:[#allocation5 + $0x8] sm:$0xf]
    %v126 = vld [vmem:[#allocation5 + $0xc] sm:$0xf]
    %v127 = vld [vmem:[%s2] sm:$0x1]
    %v129 = vlaneseq
    %v130 = vshrl.u32 %v129, 7
    %v131 = vsub.s32 0, %v130
    %v132 = vrot.slane %v127, %v131
    %v138 = vunpack.c.l.b16 %v123
    %v139 = vunpack.c.l.b16 %v124
    %v140 = vunpack.c.l.b16 %v125
    %v141 = vunpack.c.l.b16 %v126
    %v142 = vpack.c.b16 %v139, %v138
    %v143 = vpack.c.b16 %v141, %v140
    %vm146 = vcmask 261120
    %v148 = vsel %vm146, %v122, 0
    %150 = vmatprep.subr.bf16.mxu0 0
    %151 = vmatpush1.bf16.msra.mxu0 %v142
    %152 = vmatprep.subr.bf16.mxu0 0
    %153 = vmatpush1.bf16.msra.mxu0 %v143
    %154 = vmatprep.subr.bf16.mxu0 0
    %155 = vmatpush1.bf16.msra.mxu0 0
    %156 = vmatprep.subr.bf16.mxu0 0
    %157 = vmatpush1.bf16.msra.mxu0 0
    %158 = vmatprep.subr.bf16.mxu0 0
    %159 = vmatpush1.bf16.msra.mxu0 0
    %160 = vmatprep.subr.bf16.mxu0 0
    %161 = vmatpush1.bf16.msra.mxu0 0
    %162 = vmatprep.subr.bf16.mxu0 0
    %163 = vmatpush1.bf16.msra.mxu0 0
    %164 = vmatprep.subr.bf16.mxu0 0
    %165 = vmatpush1.bf16.msra.mxu0 0
    %166 = vmatprep.subr.bf16.mxu0 0
    %167 = vmatpush1.bf16.msra.mxu0 0
    %168 = vmatprep.subr.bf16.mxu0 0
    %169 = vmatpush1.bf16.msra.mxu0 0
    %170 = vmatprep.subr.bf16.mxu0 0
    %171 = vmatpush1.bf16.msra.mxu0 0
    %172 = vmatprep.subr.bf16.mxu0 0
    %173 = vmatpush1.bf16.msra.mxu0 0
    %174 = vmatprep.subr.bf16.mxu0 0
    %175 = vmatpush1.bf16.msra.mxu0 0
    %176 = vmatprep.subr.bf16.mxu0 0
    %177 = vmatpush1.bf16.msra.mxu0 0
    %178 = vmatprep.subr.bf16.mxu0 0
    %179 = vmatpush1.bf16.msra.mxu0 0
    %180 = vmatprep.subr.bf16.mxu0 0
    %181 = vmatpush1.bf16.msra.mxu0 0
    %182 = vmatprep.mubr.bf16.mxu0 0
    %183 = vmatmul.mubr.bf16.gmra.mrb[0].mxu0 %v148
    %v184 = vpop.f32.mrb[0].mxu0
    %v185 = vadd.f32 %v132, %v184
    %v186 = vpop.f32.mrb[0].mxu0
    %v187 = vpop.f32.mrb[0].mxu0
    %v188 = vpop.f32.mrb[0].mxu0
    %189 = vdwg.mxu0
    %v190 = vmax.f32 %v185, 0.0
    %v191 = vpack.c.bf16 %v190, %v190
    %v192 = vld [vmem:[#allocation7] sm:$0xf]
    %v193 = vld [vmem:[#allocation7 + $0x4] sm:$0xf]
    %v194 = vld [vmem:[#allocation7 + $0x8] sm:$0xf]
    %v195 = vld [vmem:[#allocation7 + $0xc] sm:$0xf]
    %v196 = vld [vmem:[%s4] sm:$0x1]
    %v198 = vlaneseq
    %v199 = vshrl.u32 %v198, 7
    %v200 = vsub.s32 0, %v199
    %v201 = vrot.slane %v196, %v200
    %v207 = vunpack.c.l.b16 %v192
    %v208 = vunpack.c.l.b16 %v193
    %v209 = vunpack.c.l.b16 %v194
    %v210 = vunpack.c.l.b16 %v195
    %v211 = vpack.c.b16 %v208, %v207
    %v212 = vpack.c.b16 %v210, %v209
    %v216 = vsel %vm146, %v191, 0
    %218 = vmatprep.subr.bf16.mxu0 0
    %219 = vmatpush1.bf16.msra.mxu0 %v211
    %220 = vmatprep.subr.bf16.mxu0 0
    %221 = vmatpush1.bf16.msra.mxu0 %v212
    %222 = vmatprep.subr.bf16.mxu0 0
    %223 = vmatpush1.bf16.msra.mxu0 0
    %224 = vmatprep.subr.bf16.mxu0 0
    %225 = vmatpush1.bf16.msra.mxu0 0
    %226 = vmatprep.subr.bf16.mxu0 0
    %227 = vmatpush1.bf16.msra.mxu0 0
    %228 = vmatprep.subr.bf16.mxu0 0
    %229 = vmatpush1.bf16.msra.mxu0 0
    %230 = vmatprep.subr.bf16.mxu0 0
    %231 = vmatpush1.bf16.msra.mxu0 0
    %232 = vmatprep.subr.bf16.mxu0 0
    %233 = vmatpush1.bf16.msra.mxu0 0
    %234 = vmatprep.subr.bf16.mxu0 0
    %235 = vmatpush1.bf16.msra.mxu0 0
    %236 = vmatprep.subr.bf16.mxu0 0
    %237 = vmatpush1.bf16.msra.mxu0 0
    %238 = vmatprep.subr.bf16.mxu0 0
    %239 = vmatpush1.bf16.msra.mxu0 0
    %240 = vmatprep.subr.bf16.mxu0 0
    %241 = vmatpush1.bf16.msra.mxu0 0
    %242 = vmatprep.subr.bf16.mxu0 0
    %243 = vmatpush1.bf16.msra.mxu0 0
    %244 = vmatprep.subr.bf16.mxu0 0
    %245 = vmatpush1.bf16.msra.mxu0 0
    %246 = vmatprep.subr.bf16.mxu0 0
    %247 = vmatpush1.bf16.msra.mxu0 0
    %248 = vmatprep.subr.bf16.mxu0 0
    %249 = vmatpush1.bf16.msra.mxu0 0
    %250 = vmatprep.mubr.bf16.mxu0 0
    %251 = vmatmul.mubr.bf16.gmra.mrb[0].mxu0 %v216
    %v252 = vpop.f32.mrb[0].mxu0
    %v253 = vadd.f32 %v201, %v252
    %v254 = vpop.f32.mrb[0].mxu0
    %v255 = vpop.f32.mrb[0].mxu0
    %v256 = vpop.f32.mrb[0].mxu0
    %257 = vdwg.mxu0
    %v258 = vmax.f32 %v253, 0.0
    %v259 = vpack.c.bf16 %v258, %v258
    %v260 = vld [vmem:[#allocation8] sm:$0xf]
    %v261 = vld [vmem:[#allocation8 + $0x10] sm:$0xf]
    %v262 = vld [vmem:[#allocation8 + $0x20] sm:$0xf]
    %v263 = vld [vmem:[#allocation8 + $0x30] sm:$0xf]
    %v264 = vld [vmem:[%s6] sm:$0x1]
    %v266 = vlaneseq
    %v267 = vshrl.u32 %v266, 7
    %v268 = vsub.s32 0, %v267
    %v269 = vrot.slane %v264, %v268
    %v275 = vunpack.c.l.b16 %v260
    %v276 = vunpack.c.l.b16 %v261
    %v277 = vunpack.c.l.b16 %v262
    %v278 = vunpack.c.l.b16 %v263
    %v279 = vpack.c.b16 %v276, %v275
    %v280 = vpack.c.b16 %v278, %v277
    %v284 = vsel %vm146, %v259, 0
    %286 = vmatprep.subr.bf16.mxu0 0
    %287 = vmatpush1.bf16.msra.mxu0 %v279
    %288 = vmatprep.subr.bf16.mxu0 0
    %289 = vmatpush1.bf16.msra.mxu0 %v280
    %290 = vmatprep.subr.bf16.mxu0 0
    %291 = vmatpush1.bf16.msra.mxu0 0
    %292 = vmatprep.subr.bf16.mxu0 0
    %293 = vmatpush1.bf16.msra.mxu0 0
    %294 = vmatprep.subr.bf16.mxu0 0
    %295 = vmatpush1.bf16.msra.mxu0 0
    %296 = vmatprep.subr.bf16.mxu0 0
    %297 = vmatpush1.bf16.msra.mxu0 0
    %298 = vmatprep.subr.bf16.mxu0 0
    %299 = vmatpush1.bf16.msra.mxu0 0
    %300 = vmatprep.subr.bf16.mxu0 0
    %301 = vmatpush1.bf16.msra.mxu0 0
    %302 = vmatprep.subr.bf16.mxu0 0
    %303 = vmatpush1.bf16.msra.mxu0 0
    %304 = vmatprep.subr.bf16.mxu0 0
    %305 = vmatpush1.bf16.msra.mxu0 0
    %306 = vmatprep.subr.bf16.mxu0 0
    %307 = vmatpush1.bf16.msra.mxu0 0
    %308 = vmatprep.subr.bf16.mxu0 0
    %309 = vmatpush1.bf16.msra.mxu0 0
    %310 = vmatprep.subr.bf16.mxu0 0
    %311 = vmatpush1.bf16.msra.mxu0 0
    %312 = vmatprep.subr.bf16.mxu0 0
    %313 = vmatpush1.bf16.msra.mxu0 0
    %314 = vmatprep.subr.bf16.mxu0 0
    %315 = vmatpush1.bf16.msra.mxu0 0
    %316 = vmatprep.subr.bf16.mxu0 0
    %317 = vmatpush1.bf16.msra.mxu0 0
    %318 = vmatprep.mubr.bf16.mxu0 0
    %319 = vmatmul.mubr.bf16.gmra.mrb[0].mxu0 %v284
    %v320 = vpop.f32.mrb[0].mxu0
    %v321 = vadd.f32 %v269, %v320
    %v322 = vpop.f32.mrb[0].mxu0
    %v323 = vpop.f32.mrb[0].mxu0
    %v324 = vpop.f32.mrb[0].mxu0
    %325 = vdwg.mxu0
    %v326 = vmax.f32 %v321, 0.0
    %v327 = vld [vmem:[%s8] sm:$0x1]
    %v329 = vlaneseq
    %v330 = vshrl.u32 %v329, 7
    %v331 = vsub.s32 0, %v330
    %v332 = vrot.slane %v327, %v331
    %v334 = vmul.f32 %v326, %v332
    %335 = vadd.xlane.f32.xlu0 %v334
    %v336 = vpop.xlane.xlu0 %335
    %v337 = vld [vmem:[#allocation8 + $0x4] sm:$0xf]
    %v338 = vld [vmem:[#allocation8 + $0x14] sm:$0xf]
    %v339 = vld [vmem:[#allocation8 + $0x24] sm:$0xf]
    %v340 = vld [vmem:[#allocation8 + $0x34] sm:$0xf]
    %v341 = vld [vmem:[%s6 + $0x1] sm:$0x1]
    %v343 = vlaneseq
    %v344 = vshrl.u32 %v343, 7
    %v345 = vsub.s32 0, %v344
    %v346 = vrot.slane %v341, %v345
    %v352 = vunpack.c.l.b16 %v337
    %v353 = vunpack.c.l.b16 %v338
    %v354 = vunpack.c.l.b16 %v339
    %v355 = vunpack.c.l.b16 %v340
    %v356 = vpack.c.b16 %v353, %v352
    %v357 = vpack.c.b16 %v355, %v354
    %360 = vmatprep.subr.bf16.mxu0 0
    %361 = vmatpush1.bf16.msra.mxu0 %v356
    %362 = vmatprep.subr.bf16.mxu0 0
    %363 = vmatpush1.bf16.msra.mxu0 %v357
    %364 = vmatprep.subr.bf16.mxu0 0
    %365 = vmatpush1.bf16.msra.mxu0 0
    %366 = vmatprep.subr.bf16.mxu0 0
    %367 = vmatpush1.bf16.msra.mxu0 0
    %368 = vmatprep.subr.bf16.mxu0 0
    %369 = vmatpush1.bf16.msra.mxu0 0
    %370 = vmatprep.subr.bf16.mxu0 0
    %371 = vmatpush1.bf16.msra.mxu0 0
    %372 = vmatprep.subr.bf16.mxu0 0
    %373 = vmatpush1.bf16.msra.mxu0 0
    %374 = vmatprep.subr.bf16.mxu0 0
    %375 = vmatpush1.bf16.msra.mxu0 0
    %376 = vmatprep.subr.bf16.mxu0 0
    %377 = vmatpush1.bf16.msra.mxu0 0
    %378 = vmatprep.subr.bf16.mxu0 0
    %379 = vmatpush1.bf16.msra.mxu0 0
    %380 = vmatprep.subr.bf16.mxu0 0
    %381 = vmatpush1.bf16.msra.mxu0 0
    %382 = vmatprep.subr.bf16.mxu0 0
    %383 = vmatpush1.bf16.msra.mxu0 0
    %384 = vmatprep.subr.bf16.mxu0 0
    %385 = vmatpush1.bf16.msra.mxu0 0
    %386 = vmatprep.subr.bf16.mxu0 0
    %387 = vmatpush1.bf16.msra.mxu0 0
    %388 = vmatprep.subr.bf16.mxu0 0
    %389 = vmatpush1.bf16.msra.mxu0 0
    %390 = vmatprep.subr.bf16.mxu0 0
    %391 = vmatpush1.bf16.msra.mxu0 0
    %392 = vmatprep.mubr.bf16.mxu0 0
    %393 = vmatmul.mubr.bf16.gmra.mrb[0].mxu0 %v284
    %v394 = vpop.f32.mrb[0].mxu0
    %v395 = vadd.f32 %v346, %v394
    %v396 = vpop.f32.mrb[0].mxu0
    %v397 = vpop.f32.mrb[0].mxu0
    %v398 = vpop.f32.mrb[0].mxu0
    %399 = vdwg.mxu0
    %v400 = vmax.f32 %v395, 0.0
    %v401 = vld [vmem:[%s8 + $0x1] sm:$0x1]
    %v403 = vlaneseq
    %v404 = vshrl.u32 %v403, 7
    %v405 = vsub.s32 0, %v404
    %v406 = vrot.slane %v401, %v405
    %v408 = vmul.f32 %v400, %v406
    %409 = vadd.xlane.f32.xlu0 %v408
    %v410 = vpop.xlane.xlu0 %409
    %v411 = vadd.f32 %v336, %v410
    %v412 = vld [vmem:[#allocation8 + $0x8] sm:$0xf]
    %v413 = vld [vmem:[#allocation8 + $0x18] sm:$0xf]
    %v414 = vld [vmem:[#allocation8 + $0x28] sm:$0xf]
    %v415 = vld [vmem:[#allocation8 + $0x38] sm:$0xf]
    %v416 = vld [vmem:[%s6 + $0x2] sm:$0x1]
    %v418 = vlaneseq
    %v419 = vshrl.u32 %v418, 7
    %v420 = vsub.s32 0, %v419
    %v421 = vrot.slane %v416, %v420
    %v427 = vunpack.c.l.b16 %v412
    %v428 = vunpack.c.l.b16 %v413
    %v429 = vunpack.c.l.b16 %v414
    %v430 = vunpack.c.l.b16 %v415
    %v431 = vpack.c.b16 %v428, %v427
    %v432 = vpack.c.b16 %v430, %v429
    %435 = vmatprep.subr.bf16.mxu0 0
    %436 = vmatpush1.bf16.msra.mxu0 %v431
    %437 = vmatprep.subr.bf16.mxu0 0
    %438 = vmatpush1.bf16.msra.mxu0 %v432
    %439 = vmatprep.subr.bf16.mxu0 0
    %440 = vmatpush1.bf16.msra.mxu0 0
    %441 = vmatprep.subr.bf16.mxu0 0
    %442 = vmatpush1.bf16.msra.mxu0 0
    %443 = vmatprep.subr.bf16.mxu0 0
    %444 = vmatpush1.bf16.msra.mxu0 0
    %445 = vmatprep.subr.bf16.mxu0 0
    %446 = vmatpush1.bf16.msra.mxu0 0
    %447 = vmatprep.subr.bf16.mxu0 0
    %448 = vmatpush1.bf16.msra.mxu0 0
    %449 = vmatprep.subr.bf16.mxu0 0
    %450 = vmatpush1.bf16.msra.mxu0 0
    %451 = vmatprep.subr.bf16.mxu0 0
    %452 = vmatpush1.bf16.msra.mxu0 0
    %453 = vmatprep.subr.bf16.mxu0 0
    %454 = vmatpush1.bf16.msra.mxu0 0
    %455 = vmatprep.subr.bf16.mxu0 0
    %456 = vmatpush1.bf16.msra.mxu0 0
    %457 = vmatprep.subr.bf16.mxu0 0
    %458 = vmatpush1.bf16.msra.mxu0 0
    %459 = vmatprep.subr.bf16.mxu0 0
    %460 = vmatpush1.bf16.msra.mxu0 0
    %461 = vmatprep.subr.bf16.mxu0 0
    %462 = vmatpush1.bf16.msra.mxu0 0
    %463 = vmatprep.subr.bf16.mxu0 0
    %464 = vmatpush1.bf16.msra.mxu0 0
    %465 = vmatprep.subr.bf16.mxu0 0
    %466 = vmatpush1.bf16.msra.mxu0 0
    %467 = vmatprep.mubr.bf16.mxu0 0
    %468 = vmatmul.mubr.bf16.gmra.mrb[0].mxu0 %v284
    %v469 = vpop.f32.mrb[0].mxu0
    %v470 = vadd.f32 %v421, %v469
    %v471 = vpop.f32.mrb[0].mxu0
    %v472 = vpop.f32.mrb[0].mxu0
    %v473 = vpop.f32.mrb[0].mxu0
    %474 = vdwg.mxu0
    %v475 = vmax.f32 %v470, 0.0
    %v476 = vld [vmem:[%s8 + $0x2] sm:$0x1]
    %v478 = vlaneseq
    %v479 = vshrl.u32 %v478, 7
    %v480 = vsub.s32 0, %v479
    %v481 = vrot.slane %v476, %v480
    %v483 = vmul.f32 %v475, %v481
    %484 = vadd.xlane.f32.xlu0 %v483
    %v485 = vpop.xlane.xlu0 %484
    %v486 = vadd.f32 %v411, %v485
    %v487 = vld [vmem:[#allocation8 + $0xc] sm:$0xf]
    %v488 = vld [vmem:[#allocation8 + $0x1c] sm:$0xf]
    %v489 = vld [vmem:[#allocation8 + $0x2c] sm:$0xf]
    %v490 = vld [vmem:[#allocation8 + $0x3c] sm:$0xf]
    %v491 = vld [vmem:[%s6 + $0x3] sm:$0x1]
    %v493 = vlaneseq
    %v494 = vshrl.u32 %v493, 7
    %v495 = vsub.s32 0, %v494
    %v496 = vrot.slane %v491, %v495
    %v502 = vunpack.c.l.b16 %v487
    %v503 = vunpack.c.l.b16 %v488
    %v504 = vunpack.c.l.b16 %v489
    %v505 = vunpack.c.l.b16 %v490
    %v506 = vpack.c.b16 %v503, %v502
    %v507 = vpack.c.b16 %v505, %v504
    %510 = vmatprep.subr.bf16.mxu0 0
    %511 = vmatpush1.bf16.msra.mxu0 %v506
    %512 = vmatprep.subr.bf16.mxu0 0
    %513 = vmatpush1.bf16.msra.mxu0 %v507
    %514 = vmatprep.subr.bf16.mxu0 0
    %515 = vmatpush1.bf16.msra.mxu0 0
    %516 = vmatprep.subr.bf16.mxu0 0
    %517 = vmatpush1.bf16.msra.mxu0 0
    %518 = vmatprep.subr.bf16.mxu0 0
    %519 = vmatpush1.bf16.msra.mxu0 0
    %520 = vmatprep.subr.bf16.mxu0 0
    %521 = vmatpush1.bf16.msra.mxu0 0
    %522 = vmatprep.subr.bf16.mxu0 0
    %523 = vmatpush1.bf16.msra.mxu0 0
    %524 = vmatprep.subr.bf16.mxu0 0
    %525 = vmatpush1.bf16.msra.mxu0 0
    %526 = vmatprep.subr.bf16.mxu0 0
    %527 = vmatpush1.bf16.msra.mxu0 0
    %528 = vmatprep.subr.bf16.mxu0 0
    %529 = vmatpush1.bf16.msra.mxu0 0
    %530 = vmatprep.subr.bf16.mxu0 0
    %531 = vmatpush1.bf16.msra.mxu0 0
    %532 = vmatprep.subr.bf16.mxu0 0
    %533 = vmatpush1.bf16.msra.mxu0 0
    %534 = vmatprep.subr.bf16.mxu0 0
    %535 = vmatpush1.bf16.msra.mxu0 0
    %536 = vmatprep.subr.bf16.mxu0 0
    %537 = vmatpush1.bf16.msra.mxu0 0
    %538 = vmatprep.subr.bf16.mxu0 0
    %539 = vmatpush1.bf16.msra.mxu0 0
    %540 = vmatprep.subr.bf16.mxu0 0
    %541 = vmatpush1.bf16.msra.mxu0 0
    %542 = vmatprep.mubr.bf16.mxu0 0
    %543 = vmatmul.mubr.bf16.gmra.mrb[0].mxu0 %v284
    %v544 = vpop.f32.mrb[0].mxu0
    %v545 = vadd.f32 %v496, %v544
    %v546 = vpop.f32.mrb[0].mxu0
    %v547 = vpop.f32.mrb[0].mxu0
    %v548 = vpop.f32.mrb[0].mxu0
    %549 = vdwg.mxu0
    %v550 = vmax.f32 %v545, 0.0
    %v551 = vld [vmem:[%s8 + $0x3] sm:$0x1]
    %v553 = vlaneseq
    %v554 = vshrl.u32 %v553, 7
    %v555 = vsub.s32 0, %v554
    %v556 = vrot.slane %v551, %v555
    %v558 = vmul.f32 %v550, %v556
    %559 = vadd.xlane.f32.xlu0 %v558
    %v560 = vpop.xlane.xlu0 %559
    %v561 = vadd.f32 %v486, %v560
    %v562 = vld [vmem:[%s7] sm:$0x1]
    %v564 = vlaneseq
    %v565 = vshrl.u32 %v564, 7
    %v566 = vsub.s32 0, %v565
    %v567 = vrot.slane %v562, %v566
    %v569 = vmul.f32 %v121, %v567
    %vm570 = vcmask 64512
    %v571 = vsel %vm570, %v569, 0.0
    %572 = vadd.xlane.f32.xlu0 %v571
    %v573 = vpop.xlane.xlu0 %572
    %v574 = vadd.f32 %v561, %v573
    %v575 = vld [vmem:[#allocation2] sm:$0x1]
    %v577 = vlaneseq
    %v578 = vshrl.u32 %v577, 7
    %v579 = vsub.s32 0, %v578
    %v580 = vrot.slane %v575, %v579
    %v582 = vadd.f32 %v574, %v580
    %vm583 = vcmask 7168
    %584 = vst.msk [vmem:[%s10] sm:$0xff] %vm583, %v582
    // Predicated region
    $region58: #{tpu_custom_call.1} parent=1 // pred_check
      _
    $region59: #{tpu_custom_call.1} parent=1 // pred_check_branch
      %586 = sbr.rel (0) target = $region61
    $region60: #{tpu_custom_call.1} parent=1 // pred_region
      _
    $region61: #{tpu_custom_call.1} parent=1 // pred_fallthru
      _
    // Predicated region
    $region62: #{tpu_custom_call.1} parent=1 // pred_check
      _
    $region63: #{tpu_custom_call.1} parent=1 // pred_check_branch
      %588 = sbr.rel (0) target = $region65
    $region64: #{tpu_custom_call.1} parent=1 // pred_region
      _
    $region65: #{tpu_custom_call.1} parent=1 // pred_fallthru
      _
    %589 = vsyncpa [#allocation4], 1
    %590 = vsyncpa [#allocation6], 1
    %591 = vsyncpa [#allocation9], 1

</llo_original>
